<compile_context>
chip_gen: v6e
topology: v6e:2x2x1
jax: 0.10.0
libtpu: 0.0.40
codegen_flags: <defaults>
</compile_context>

<pallas_src>
import jax
import jax.numpy as jnp
from jax.experimental import pallas as pl
from jax.experimental.pallas import tpu as pltpu


_MIN_PALLAS_BYTES = 1 * 1024 * 1024   # below this a kernel launch is pure overhead
_CHUNK_BYTES = 8 * 1024 * 1024        # target per-DMA-descriptor size (multi-MiB)
_MAX_OUTSTANDING = 8                  # cap on concurrently outstanding DMAs / sems


def _cdiv(a, b):
    return -(-a // b)


def _dim0_chunks(d0, total_bytes, chunk_bytes):
    """Static (start, size) chunks along axis 0 for the HBM->HBM DMA copy."""
    if d0 <= 1 or total_bytes <= chunk_bytes:
        return [(0, d0)]
    n_chunks = min(_MAX_OUTSTANDING, _cdiv(total_bytes, chunk_bytes), d0)
    base, rem = divmod(d0, n_chunks)
    chunks, start = [], 0
    for i in range(n_chunks):
        size = base + (1 if i < rem else 0)
        chunks.append((start, size))
        start += size
    return chunks


def _make_hbm_copy_kernel(chunks):
    """Kernel: issue one HBM->HBM DMA per chunk, then wait on all of them."""

    def kernel(x_ref, o_ref, sems):
        descs = [
            pltpu.make_async_copy(
                x_ref.at[pl.ds(start, size)],
                o_ref.at[pl.ds(start, size)],
                sems.at[i],
            )
            for i, (start, size) in enumerate(chunks)
        ]
        for d in descs:      # issue all (up to _MAX_OUTSTANDING outstanding DMAs)
            d.start()
        for d in descs:      # then drain
            d.wait()

    return kernel


def _alias_kernel(x_ref, o_ref):
    # Output aliases input (input_output_aliases={0: 0}); nothing to move.
    del x_ref, o_ref


def encoder_forward(X, *args, min_pallas_bytes=_MIN_PALLAS_BYTES,
                    chunk_bytes=_CHUNK_BYTES, donate_input=False):
    """Pallas realization of Encoder.forward for the abstract base class.

    X: array of any shape/dtype (demo uses (batch, seq, hidden)).  Extra
    *args are accepted to mirror the PyTorch signature but unused, exactly
    like the base interface.  Semantics: identity pass-through of X.

    donate_input=True makes the output alias the input buffer (zero HBM
    traffic) but donates X; callers must not reuse X afterwards.
    """
    del args  # unused, as in the abstract base class

    nbytes = int(X.size) * jnp.dtype(X.dtype).itemsize
    if X.ndim == 0 or X.size == 0 or nbytes < min_pallas_bytes:
        # Returning X itself is the true zero-cost realization; kernel-launch
        # overhead dominates tiny inputs.
        return X

    cost = pl.CostEstimate(
        flops=0, transcendentals=0,
        bytes_accessed=0 if donate_input else 2 * nbytes)

    if donate_input:
        # True zero-copy: output buffer IS the input buffer (X is donated).
        return pl.pallas_call(
            _alias_kernel,
            out_shape=jax.ShapeDtypeStruct(X.shape, X.dtype),
            in_specs=[pl.BlockSpec(memory_space=pl.ANY)],
            out_specs=pl.BlockSpec(memory_space=pl.ANY),
            input_output_aliases={0: 0},
            cost_estimate=cost,
        )(X)

    # Materialized copy: direct HBM->HBM DMAs, no VMEM bounce, no grid.
    chunks = _dim0_chunks(X.shape[0], nbytes, chunk_bytes)
    return pl.pallas_call(
        _make_hbm_copy_kernel(chunks),
        out_shape=jax.ShapeDtypeStruct(X.shape, X.dtype),
        in_specs=[pl.BlockSpec(memory_space=pl.ANY)],    # stay in HBM
        out_specs=pl.BlockSpec(memory_space=pl.ANY),     # stay in HBM
        scratch_shapes=[pltpu.SemaphoreType.DMA((len(chunks),))],
        cost_estimate=cost,
    )(X)


if __name__ == "__main__":
    key = jax.random.PRNGKey(0)
    k0, k1 = jax.random.split(key)

    # Shapes implied by the encoder-decoder demo: (batch, seq, hidden).
    batch, seq, hidden = 2, 8, 32
    X = jax.random.normal(k0, (batch, seq, hidden), dtype=jnp.float32)

    # 1) Default path: 2 KiB input takes the small-input bypass (identity).
    out0 = jax.block_until_ready(encoder_forward(X))
    assert out0.shape == X.shape and out0.dtype == X.dtype
    assert bool(jnp.all(out0 == X))

    # 2) Force the Pallas HBM->HBM DMA copy path (single descriptor) on the
    #    same small input so the kernel itself compiles and runs on TPU.
    out1 = jax.block_until_ready(encoder_forward(X, min_pallas_bytes=0))
    assert out1.shape == X.shape and out1.dtype == X.dtype
    assert bool(jnp.all(out1 == X))

    # 3) Exercise the multi-descriptor (chunked along axis 0) path with a
    #    still-small input by shrinking the per-descriptor target.
    X2 = jax.random.normal(k1, (8, 64, 128), dtype=jnp.float32)  # 256 KiB
    out2 = jax.block_until_ready(
        encoder_forward(X2, min_pallas_bytes=0, chunk_bytes=64 * 1024))
    assert out2.shape == X2.shape and out2.dtype == X2.dtype
    assert bool(jnp.all(out2 == X2))

    print("KERNEL_OK")
</pallas_src>

<mosaic_0001>
module attributes {stable_mosaic.version = 11 : i64} {
  func.func @kernel(%arg0: memref<2x8x32xf32, #tpu.memory_space<any>>, %arg1: memref<2x8x32xf32, #tpu.memory_space<any>>, %arg2: memref<1x!tpu.dma_semaphore, #tpu.memory_space<semaphore_mem>>) attributes {dimension_semantics = [], scalar_prefetch = 0 : i64, scratch_operands = 1 : i64, tpu.core_type = #tpu.core_type<tc>} {
    %c0_i32 = arith.constant 0 : i32
    %c0_i32_0 = arith.constant 0 : i32
    %c0_i32_1 = arith.constant 0 : i32
    %c0_i32_2 = arith.constant 0 : i32
    %0 = tpu.memref_slice %arg0[%c0_i32_0, %c0_i32_1, %c0_i32_2] : memref<2x8x32xf32, #tpu.memory_space<any>> -> memref<2x8x32xf32, #tpu.memory_space<any>>
    %c0_i32_3 = arith.constant 0 : i32
    %c0_i32_4 = arith.constant 0 : i32
    %c0_i32_5 = arith.constant 0 : i32
    %1 = tpu.memref_slice %arg1[%c0_i32_3, %c0_i32_4, %c0_i32_5] : memref<2x8x32xf32, #tpu.memory_space<any>> -> memref<2x8x32xf32, #tpu.memory_space<any>>
    %2 = tpu.memref_slice %arg2[%c0_i32] : memref<1x!tpu.dma_semaphore, #tpu.memory_space<semaphore_mem>> -> memref<1x!tpu.dma_semaphore, #tpu.memory_space<semaphore_mem>>
    %3 = tpu.memref_squeeze %2 : memref<1x!tpu.dma_semaphore, #tpu.memory_space<semaphore_mem>> -> memref<!tpu.dma_semaphore, #tpu.memory_space<semaphore_mem>>
    tpu.enqueue_dma source(%0 : memref<2x8x32xf32, #tpu.memory_space<any>>) target(%1 : memref<2x8x32xf32, #tpu.memory_space<any>>) target_semaphore(%3 : memref<!tpu.dma_semaphore, #tpu.memory_space<semaphore_mem>>)
    %c0_i32_6 = arith.constant 0 : i32
    %c0_i32_7 = arith.constant 0 : i32
    %c0_i32_8 = arith.constant 0 : i32
    %c0_i32_9 = arith.constant 0 : i32
    %4 = tpu.memref_slice %arg0[%c0_i32_7, %c0_i32_8, %c0_i32_9] : memref<2x8x32xf32, #tpu.memory_space<any>> -> memref<2x8x32xf32, #tpu.memory_space<any>>
    %c0_i32_10 = arith.constant 0 : i32
    %c0_i32_11 = arith.constant 0 : i32
    %c0_i32_12 = arith.constant 0 : i32
    %5 = tpu.memref_slice %arg1[%c0_i32_10, %c0_i32_11, %c0_i32_12] : memref<2x8x32xf32, #tpu.memory_space<any>> -> memref<2x8x32xf32, #tpu.memory_space<any>>
    %6 = tpu.memref_slice %arg2[%c0_i32_6] : memref<1x!tpu.dma_semaphore, #tpu.memory_space<semaphore_mem>> -> memref<1x!tpu.dma_semaphore, #tpu.memory_space<semaphore_mem>>
    %7 = tpu.memref_squeeze %6 : memref<1x!tpu.dma_semaphore, #tpu.memory_space<semaphore_mem>> -> memref<!tpu.dma_semaphore, #tpu.memory_space<semaphore_mem>>
    tpu.wait_dma2 semaphore(%7 : memref<!tpu.dma_semaphore, #tpu.memory_space<semaphore_mem>>) src(%4 : memref<2x8x32xf32, #tpu.memory_space<any>>) dst(%5 : memref<2x8x32xf32, #tpu.memory_space<any>>)
    return
  }
}

</mosaic_0001>

<llo_original>
// kernel: tpu_custom_call.1
$region0: #{tpu_custom_call.1}
  #allocation0 [shape = 'u32[]', space=smem, size = 0x4, offset = 0x4, fixed_abs, tag = 'smem constant byte address 0x4 - core index']
  #allocation1 [shape = 'u32[144,128]{1,0:T(1,128)}', space=vmem, size = 0x12000, scoped, tag = 'internal scratch']
  #allocation2 [shape = 's32[1]{0}', space=sflag, size = 0x4, scoped, tag = 'scratch operand']
  #allocation3 [shape = 's32[]', space=sflag, size = 0x4, offset = 0, fixed_abs, tag = 'sflag constant byte address 0x0 - dummy sync flag']
  #allocation4 [shape = 'u32[0]{0}', space=smem, size = 0, offset = 0, fixed_abs, tag = 'smem constant byte address 0x0 - null']
  %s0 = inlined_call_operand.hbm [shape: f32[2,8,32], index: 0, kind: input, shape index: {}]
  %s1 = inlined_call_operand.hbm [shape: f32[2,8,32], index: 1, kind: output, shape index: {}]
  %s2 = sld [smem:[#allocation0]]
  $region2: #{tpu_custom_call.1} parent=0
    _
  %s4 = ssub.s32 1, %s2
  %s5 = scalar_select 0, %s4, %s2
  %s7 = sshll.u32 1, 14
  %s8 = sxor.u32 4294967295, %s7
  %12 = dma.general %s0, 256, %s1, [#allocation2], 131072, [#allocation4], 0, 0
  %s13 = smul.u32 2, 8
  %s14 = smul.u32 %s13, 1
  %s15 = sshll.u32 %s14, 4
  %16 = dma.done [#allocation2], %s15
  %17 = vsyncmov [#allocation2]
  %s18 = vpop.sfrf %17
  %p19 = scmp.eq.s32.totalorder %s18, 0
  %p20 = pneg %p19
  %22 = shalt.err (%p20)

</llo_original>
